<compile_context>
chip_gen: v5e
topology: v5e:2x2
jax: 0.10.0
libtpu: 0.0.40
codegen_flags: <defaults>
</compile_context>

<pallas_src>
import jax
import jax.numpy as jnp
from jax.experimental import pallas as pl
from jax.experimental.pallas import tpu as pltpu


def _add_kernel(x_ref, y_ref, o_ref):
    # Elementwise add on the whole VMEM tile (VPU).
    o_ref[...] = x_ref[...] + y_ref[...]


_LANE_CANDIDATES = (1024, 512, 256, 128)     # lane-dense last dim, multiple of 128
_TARGET_BLOCK_BYTES = 6 * 1024 * 1024        # ~6 MiB per operand per block
_VMEM_LIMIT_BYTES = 48 * 1024 * 1024         # 6 live buffers * 6 MiB + headroom


def pallas_add(x, y, donate_x=False):
    """Equivalent of Add.forward.

    JAX arrays are immutable, so inplace vs out-of-place is semantically
    identical; pass donate_x=True (with a donated x) to alias x's HBM buffer
    to the output, mirroring torch's in-place add without a third full-size
    allocation.
    """
    if x.shape != y.shape or x.dtype != y.dtype:
        # TODO(synk): torch-style broadcasting / dtype promotion is not lowered
        # to Pallas; plain XLA add is already at HBM roofline for that path.
        return x + y

    orig_shape = x.shape
    n = x.size
    itemsize = jnp.dtype(x.dtype).itemsize

    lane = next((l for l in _LANE_CANDIDATES if n % l == 0), None)
    if lane is None:
        # TODO(synk): ragged sizes (numel % 128 != 0) are not tiled in Pallas;
        # a padded path would roughly double HBM traffic, so use the XLA add.
        return x + y

    rows = n // lane
    pack = {4: 8, 2: 16, 1: 32}.get(itemsize, 8)   # sublane packing per dtype

    if rows < pack:
        # Tiny array: block covers the full (non-pack-aligned) row dim.
        tile_r = rows
    else:
        tile_r_target = max(
            pack, (_TARGET_BLOCK_BYTES // (lane * itemsize)) // pack * pack)
        # Keep >= 2 row blocks whenever possible so ("parallel",) actually
        # shards the grid across both TensorCores on v7x.
        half_rows = max(pack, ((rows // 2) // pack) * pack)
        tile_r = min(tile_r_target, half_rows)
    grid_r = pl.cdiv(rows, tile_r)   # ragged last block: Pallas clips writeback

    # Pure relabeling of contiguous HBM -- no data movement.
    x2 = x.reshape(rows, lane)
    y2 = y.reshape(rows, lane)

    extra_kwargs = {}
    if donate_x:
        # Mirrors torch's x.add_(y): reuse x's buffer for the output.
        extra_kwargs["input_output_aliases"] = {0: 0}

    out2 = pl.pallas_call(
        _add_kernel,
        out_shape=jax.ShapeDtypeStruct((rows, lane), x.dtype),
        grid_spec=pl.GridSpec(
            grid=(grid_r,),
            in_specs=[
                pl.BlockSpec((tile_r, lane), lambda i: (i, 0)),
                pl.BlockSpec((tile_r, lane), lambda i: (i, 0)),
            ],
            out_specs=pl.BlockSpec((tile_r, lane), lambda i: (i, 0)),
        ),
        compiler_params=pltpu.CompilerParams(
            # Independent row blocks: shard across TCs on v7x, neutral on
            # single-TC v5e/v6e.
            dimension_semantics=("parallel",),
            vmem_limit_bytes=_VMEM_LIMIT_BYTES,
        ),
        cost_estimate=pl.CostEstimate(
            flops=n, transcendentals=0, bytes_accessed=3 * n * itemsize),
        **extra_kwargs,
    )(x2, y2)

    return out2.reshape(orig_shape)


if __name__ == "__main__":
    key = jax.random.PRNGKey(0)
    kx, ky = jax.random.split(key)

    # NCHW, small shapes (divisible path: lane=1024, single full block)
    x = jax.random.normal(kx, (2, 4, 16, 16), dtype=jnp.float32)
    y = jax.random.normal(ky, (2, 4, 16, 16), dtype=jnp.float32)
    out = jax.block_until_ready(pallas_add(x, y))
    ref = x + y
    assert out.shape == x.shape and out.dtype == x.dtype
    assert jnp.allclose(out, ref, atol=1e-6), "mismatch vs reference (even shape)"

    # Shape whose numel is a multiple of 128 but not of the tile size:
    # exercises the ragged-grid (clipped last block) path with no wrapper pad.
    x2 = jax.random.normal(kx, (3, 5, 8, 32), dtype=jnp.float32)
    y2 = jax.random.normal(ky, (3, 5, 8, 32), dtype=jnp.float32)
    out2 = jax.block_until_ready(pallas_add(x2, y2))
    assert jnp.allclose(out2, x2 + y2, atol=1e-6), "mismatch vs reference (ragged grid)"

    print("KERNEL_OK")
</pallas_src>

<mosaic_0001>
module attributes {stable_mosaic.version = 11 : i64} {
  func.func @_add_kernel(%arg0: i32, %arg1: memref<2x1024xf32, #tpu.memory_space<vmem>>, %arg2: memref<2x1024xf32, #tpu.memory_space<vmem>>, %arg3: memref<2x1024xf32, #tpu.memory_space<vmem>>) attributes {dimension_semantics = [#tpu.dimension_semantics<parallel>], iteration_bounds = array<i64: 1>, scalar_prefetch = 0 : i64, scratch_operands = 0 : i64, tpu.core_type = #tpu.core_type<tc>, window_params = [{transform_indices = @transform_0, window_bounds = array<i64: 2, 1024>}, {transform_indices = @transform_1, window_bounds = array<i64: 2, 1024>}, {transform_indices = @transform_2, window_bounds = array<i64: 2, 1024>}]} {
    %c0 = arith.constant 0 : index
    %c0_0 = arith.constant 0 : index
    %0 = vector.load %arg1[%c0, %c0_0] : memref<2x1024xf32, #tpu.memory_space<vmem>>, vector<2x1024xf32>
    %c0_1 = arith.constant 0 : index
    %c0_2 = arith.constant 0 : index
    %1 = vector.load %arg2[%c0_1, %c0_2] : memref<2x1024xf32, #tpu.memory_space<vmem>>, vector<2x1024xf32>
    %2 = arith.addf %0, %1 : vector<2x1024xf32>
    %c0_3 = arith.constant 0 : index
    %c0_4 = arith.constant 0 : index
    %3 = vector.load %arg3[%c0_3, %c0_4] : memref<2x1024xf32, #tpu.memory_space<vmem>>, vector<2x1024xf32>
    tpu.vector_store %arg3[%c0_3, %c0_4], %2 {strides = array<i32>} : memref<2x1024xf32, #tpu.memory_space<vmem>>, vector<2x1024xf32>,
    return
  }
  func.func @transform_0(%arg0: i32) -> (i32, i32) {
    %c0_i32 = arith.constant 0 : i32
    %c0_i32_0 = arith.constant 0 : i32
    return %arg0, %c0_i32 : i32, i32
  }
  func.func @transform_1(%arg0: i32) -> (i32, i32) {
    %c0_i32 = arith.constant 0 : i32
    %c0_i32_0 = arith.constant 0 : i32
    return %arg0, %c0_i32 : i32, i32
  }
  func.func @transform_2(%arg0: i32) -> (i32, i32) {
    %c0_i32 = arith.constant 0 : i32
    %c0_i32_0 = arith.constant 0 : i32
    return %arg0, %c0_i32 : i32, i32
  }
}

</mosaic_0001>

<llo_original>
// kernel: tpu_custom_call.1
$region0: #{tpu_custom_call.1}
  #allocation0 [shape = 'u32[]', space=smem, size = 0x4, offset = 0x4, fixed_abs, tag = 'smem constant byte address 0x4 - core index']
  #allocation1 [shape = 'u32[72,128]{1,0:T(1,128)}', space=vmem, size = 0x9000, scoped, tag = 'internal scratch']
  %s0 = inlined_call_operand.hbm [shape: f32[2,1024], index: 0, kind: input, shape index: {}]
  %s1 = inlined_call_operand.hbm [shape: f32[2,1024], index: 1, kind: input, shape index: {}]
  %s2 = inlined_call_operand.hbm [shape: f32[2,1024], index: 2, kind: output, shape index: {}]
  %s3 = sld [smem:[#allocation0]]
  $region26: #{tpu_custom_call.1} parent=0
    _
  %s5 = ssub.s32 1, %s3
  %s6 = scalar_select 0, %s5, %s3
  $region1: #{tpu_custom_call.1} parent=0
    #allocation2 [shape = 'u8[8192]{0}', space=vmem, size = 0x2000, scoped, tag = 'input window, operand 0, single buffered']
    #allocation3 [shape = 's32[1]{0}', space=sflag, size = 0x4, scoped, tag = 'scoped memory for tpu_custom_call.1']
    #allocation4 [shape = 's32[1]{0}', space=sflag, size = 0x4, scoped, tag = 'scoped memory for tpu_custom_call.1']
    #allocation5 [shape = 'u8[8192]{0}', space=vmem, size = 0x2000, scoped, tag = 'input window, operand 1, single buffered']
    #allocation6 [shape = 's32[1]{0}', space=sflag, size = 0x4, scoped, tag = 'scoped memory for tpu_custom_call.1']
    #allocation7 [shape = 'u8[8192]{0}', space=vmem, size = 0x2000, scoped, tag = 'output window, operand 0, single buffered']
    %7 = vsyncpa [#allocation3], 0
    %8 = vsyncpa [#allocation6], 0
    %9 = vsyncpa [#allocation4], 0
    // Predicated region
    $region2: #{tpu_custom_call.1} parent=1 // pred_check
      _
    $region3: #{tpu_custom_call.1} parent=1 // pred_check_branch
      %11 = sbr.rel (0) target = $region5
    $region4: #{tpu_custom_call.1} parent=1 // pred_region
      %13 = vsyncadd [#allocation3], 0
      %s15 = sshll.u32 %s0, 4
      %s16 = int_to_ptr.hbm [resolvable:$true] %s15
      %s17 = sshll.u32 [#allocation2], 4
      %s18 = int_to_ptr.vmem [resolvable:$true] %s17
      %20 = dma.hbm_to_vmem [thread:$0]  %s16, 256, %s18, [#allocation3]
    $region5: #{tpu_custom_call.1} parent=1 // pred_fallthru
      _
    // Predicated region
    $region6: #{tpu_custom_call.1} parent=1 // pred_check
      _
    $region7: #{tpu_custom_call.1} parent=1 // pred_check_branch
      %22 = sbr.rel (0) target = $region9
    $region8: #{tpu_custom_call.1} parent=1 // pred_region
      %24 = vsyncadd [#allocation6], 0
      %s26 = sshll.u32 %s1, 4
      %s27 = int_to_ptr.hbm [resolvable:$true] %s26
      %s28 = sshll.u32 [#allocation5], 4
      %s29 = int_to_ptr.vmem [resolvable:$true] %s28
      %31 = dma.hbm_to_vmem [thread:$0]  %s27, 256, %s29, [#allocation6]
    $region9: #{tpu_custom_call.1} parent=1 // pred_fallthru
      _
    // Predicated region
    $region10: #{tpu_custom_call.1} parent=1 // pred_check
      _
    $region11: #{tpu_custom_call.1} parent=1 // pred_check_branch
      %33 = sbr.rel (0) target = $region13
    $region12: #{tpu_custom_call.1} parent=1 // pred_region
      %35 = dma.done [#allocation3], 256
    $region13: #{tpu_custom_call.1} parent=1 // pred_fallthru
      _
    // Predicated region
    $region14: #{tpu_custom_call.1} parent=1 // pred_check
      _
    $region15: #{tpu_custom_call.1} parent=1 // pred_check_branch
      %37 = sbr.rel (0) target = $region17
    $region16: #{tpu_custom_call.1} parent=1 // pred_region
      %39 = dma.done [#allocation6], 256
    $region17: #{tpu_custom_call.1} parent=1 // pred_fallthru
      _
    %v40 = vld [vmem:[#allocation2] sm:$0xff]
    %v41 = vld [vmem:[#allocation2 + $0x8] sm:$0xff]
    %v42 = vld [vmem:[#allocation5] sm:$0xff]
    %v43 = vld [vmem:[#allocation5 + $0x8] sm:$0xff]
    %v44 = vadd.f32 %v40, %v42
    %v45 = vadd.f32 %v41, %v43
    %46 = vst [vmem:[#allocation7] sm:$0xff] %v44
    %47 = vst [vmem:[#allocation7 + $0x8] sm:$0xff] %v45
    // Predicated region
    $region18: #{tpu_custom_call.1} parent=1 // pred_check
      _
    $region19: #{tpu_custom_call.1} parent=1 // pred_check_branch
      %49 = sbr.rel (0) target = $region21
    $region20: #{tpu_custom_call.1} parent=1 // pred_region
      %51 = vsyncadd [#allocation4], 0
      %s53 = sshll.u32 [#allocation7], 4
      %s54 = int_to_ptr.vmem [resolvable:$true] %s53
      %s55 = sshll.u32 %s2, 4
      %s56 = int_to_ptr.hbm [resolvable:$true] %s55
      %58 = dma.vmem_to_hbm [thread:$0]  %s54, 256, %s56, [#allocation4]
    $region21: #{tpu_custom_call.1} parent=1 // pred_fallthru
      _
    // Predicated region
    $region22: #{tpu_custom_call.1} parent=1 // pred_check
      _
    $region23: #{tpu_custom_call.1} parent=1 // pred_check_branch
      %60 = sbr.rel (0) target = $region25
    $region24: #{tpu_custom_call.1} parent=1 // pred_region
      %62 = dma.done [#allocation4], 256
    $region25: #{tpu_custom_call.1} parent=1 // pred_fallthru
      _
    %63 = vsyncpa [#allocation3], 1
    %64 = vsyncpa [#allocation6], 1
    %65 = vsyncpa [#allocation4], 1

</llo_original>
